<compile_context>
chip_gen: v7x
topology: tpu7x:2x2x1
jax: 0.10.0
libtpu: 0.0.40
codegen_flags: <defaults>
</compile_context>

<pallas_src>
import math

import jax
import jax.numpy as jnp
from jax.experimental import pallas as pl
from jax.experimental.pallas import tpu as pltpu


def _round_up(n, m):
    return ((n + m - 1) // m) * m


def _make_growth_kernel(n_mid, has_cond, has_time):
    """Kernel for the transposed MLP.

    Ref order:
      xT, [cT], [tT],
      W1x^T, [W1c^T], [W1t^T], b1^T,
      (Wi^T, bi^T) * n_mid,
      Wlast_col (H_last, 1), blast (1, 1),
      out_ref (1, TB)
    """

    def kernel(*refs):
        it = iter(refs)
        x_t = next(it)
        c_t = next(it) if has_cond else None
        t_t = next(it) if has_time else None
        w1x = next(it)
        w1c = next(it) if has_cond else None
        w1t = next(it) if has_time else None
        b1 = next(it)
        mids = [(next(it), next(it)) for _ in range(n_mid)]
        w_last = next(it)
        b_last = next(it)
        out_ref = next(it)

        # --- First layer: fused concat via split W1 (no (B, F+C+1) array). ---
        # h^T = W1x^T @ x^T (+ W1c^T @ c^T) (+ w1t_col * t_row) + b1_col
        h = jnp.dot(w1x[...], x_t[...], preferred_element_type=jnp.float32)
        if has_cond:
            h = h + jnp.dot(w1c[...], c_t[...],
                            preferred_element_type=jnp.float32)
        if has_time:
            # (H, 1) * (1, TB) outer-product broadcast on the VPU
            # (avoids a K=1 MXU matmul for the time column).
            h = h + w1t[...].astype(jnp.float32) * t_t[...].astype(jnp.float32)
        h = jnp.maximum(h + b1[...].astype(jnp.float32), 0.0)  # ReLU

        # --- Hidden layers (if any). ---
        for w_ref, b_ref in mids:
            h = jnp.dot(w_ref[...], h.astype(w_ref.dtype),
                        preferred_element_type=jnp.float32)
            h = jnp.maximum(h + b_ref[...].astype(jnp.float32), 0.0)

        # --- Final (H -> 1) layer: VPU multiply + sublane reduction. ---
        # Produces a lane-dense (1, TB) row -> dense stores.
        out = jnp.sum(h * w_last[...].astype(jnp.float32),
                      axis=0, keepdims=True) + b_last[0, 0]
        out_ref[...] = out.astype(out_ref.dtype)

    return kernel


def init_growth_rate_params(key, feature_dims, condition_dims, layers,
                            use_time=True, dtype=jnp.float32):
    """nn.Linear-style init. Weights stored [in_features, out_features]."""
    d_in = feature_dims + condition_dims + (1 if use_time else 0)
    dims = [d_in] + list(layers) + [1]
    params = []
    for i in range(len(dims) - 1):
        fan_in, fan_out = dims[i], dims[i + 1]
        key, kw, kb = jax.random.split(key, 3)
        bound = 1.0 / math.sqrt(fan_in)
        w = jax.random.uniform(kw, (fan_in, fan_out), dtype=dtype,
                               minval=-bound, maxval=bound)
        b = jax.random.uniform(kb, (1, fan_out), dtype=dtype,
                               minval=-bound, maxval=bound)
        params.append((w, b))
    return params


def growth_rate_forward(x, c, t, params, *, condition_dims, use_time=True,
                        block_batch=512):
    """Forward pass of GrowthRateModel.

    x: (B, feature_dims), c: (B, condition_dims) or None, t: (B,) or None.
    Returns (B, 1).
    """
    B, feature_dims = x.shape
    has_cond = condition_dims > 0
    has_time = bool(use_time)
    if has_cond:
        assert c is not None, "Condition must be provided"
    if has_time:
        assert t is not None, "Time must be provided when use_time=True"
    assert len(params) >= 2, "need at least one hidden layer + output layer"
    n_mid = len(params) - 2

    # --- Batch tiling: batch lives on lanes, so TB is a multiple of 128. ---
    TB = max(128, _round_up(block_batch, 128))
    B_pad = _round_up(B, 128)
    if B_pad <= TB:
        TB = B_pad          # single tile, block == full array
    else:
        B_pad = _round_up(B, TB)
    grid = B_pad // TB
    pad = B_pad - B

    # --- Layout plumbing: transposed, zero-padded activations. ---
    x_t = jnp.pad(x, ((0, pad), (0, 0))).T                       # (F, B_pad)
    c_t = jnp.pad(c, ((0, pad), (0, 0))).T if has_cond else None  # (C, B_pad)
    t_t = jnp.pad(t, (0, pad)).reshape(1, B_pad) if has_time else None

    # --- Split + transpose the first Linear (fuses the concat). ---
    w1, b1 = params[0]
    off = feature_dims
    w1x_T = w1[:feature_dims].T                                   # (H, F)
    w1c_T = None
    if has_cond:
        w1c_T = w1[off:off + condition_dims].T                    # (H, C)
        off += condition_dims
    w1t_T = w1[off:off + 1].T if has_time else None               # (H, 1)
    b1_T = b1.T                                                   # (H, 1)

    mids_T = [(w.T, b.T) for (w, b) in params[1:-1]]              # (Ho,Hi),(Ho,1)
    w_last, b_last = params[-1]
    w_last_col = w_last                                           # (H_last, 1)
    b_last_2d = b_last.reshape(1, 1)                              # (1, 1)

    # --- Build inputs and their BlockSpecs in lockstep. ---
    inputs, in_specs = [], []

    def add_batch(arr, rows):
        inputs.append(arr)
        in_specs.append(pl.BlockSpec((rows, TB), lambda i: (0, i)))

    def add_param(arr):
        inputs.append(arr)
        # Constant index_map -> DMA'd once, resident in VMEM across the grid.
        in_specs.append(pl.BlockSpec(arr.shape, lambda i: (0, 0)))

    add_batch(x_t, feature_dims)
    if has_cond:
        add_batch(c_t, condition_dims)
    if has_time:
        add_batch(t_t, 1)
    add_param(w1x_T)
    if has_cond:
        add_param(w1c_T)
    if has_time:
        add_param(w1t_T)
    add_param(b1_T)
    for w_T, b_T in mids_T:
        add_param(w_T)
        add_param(b_T)
    add_param(w_last_col)
    add_param(b_last_2d)

    kernel = _make_growth_kernel(n_mid, has_cond, has_time)

    out_row = pl.pallas_call(
        kernel,
        out_shape=jax.ShapeDtypeStruct((1, B_pad), x.dtype),
        grid=(grid,),
        in_specs=in_specs,
        out_specs=pl.BlockSpec((1, TB), lambda i: (0, i)),
        compiler_params=pltpu.CompilerParams(
            dimension_semantics=("parallel",)),   # megacore-shardable on v7x
    )(*inputs)

    return out_row[0, :B].reshape(B, 1)


def growth_rate_reference(x, c, t, params, *, condition_dims, use_time=True):
    """Pure-JAX reference (mirrors the PyTorch module)."""
    inp = x
    if condition_dims > 0:
        inp = jnp.concatenate([inp, c], axis=1)
    if use_time:
        inp = jnp.concatenate([inp, t[:, None]], axis=1)
    h = inp
    for i, (w, b) in enumerate(params):
        h = h @ w + b
        if i < len(params) - 1:
            h = jnp.maximum(h, 0.0)
    return h


if __name__ == "__main__":
    key = jax.random.PRNGKey(0)
    kx, kc, kt, kp, kx2, kt2, kp2 = jax.random.split(key, 7)

    # Config 1: matches the module defaults (conditions + time, one hidden layer).
    batch, feature_dims, condition_dims, layers, use_time = 8, 4, 3, [64], True
    x = jax.random.normal(kx, (batch, feature_dims), dtype=jnp.float32)
    c = jax.random.normal(kc, (batch, condition_dims), dtype=jnp.float32)
    t = jax.random.uniform(kt, (batch,), dtype=jnp.float32)
    params = init_growth_rate_params(kp, feature_dims, condition_dims, layers,
                                     use_time=use_time)

    out = growth_rate_forward(x, c, t, params,
                              condition_dims=condition_dims, use_time=use_time)
    out = jax.block_until_ready(out)
    ref = growth_rate_reference(x, c, t, params,
                                condition_dims=condition_dims, use_time=use_time)
    assert out.shape == (batch, 1), f"bad output shape {out.shape}"
    assert jnp.allclose(out, ref, atol=1e-4, rtol=1e-4), "mismatch vs reference"

    # Config 2: no condition, two hidden layers, odd batch (padding + mid layers).
    batch2, layers2 = 5, [32, 16]
    x2 = jax.random.normal(kx2, (batch2, feature_dims), dtype=jnp.float32)
    t2 = jax.random.uniform(kt2, (batch2,), dtype=jnp.float32)
    params2 = init_growth_rate_params(kp2, feature_dims, 0, layers2, use_time=True)

    out2 = jax.block_until_ready(
        growth_rate_forward(x2, None, t2, params2,
                            condition_dims=0, use_time=True))
    ref2 = growth_rate_reference(x2, None, t2, params2,
                                 condition_dims=0, use_time=True)
    assert out2.shape == (batch2, 1), f"bad output shape {out2.shape}"
    assert jnp.allclose(out2, ref2, atol=1e-4, rtol=1e-4), "mismatch vs reference (cfg2)"

    print("KERNEL_OK")
</pallas_src>

<mosaic_0001>
module attributes {stable_mosaic.version = 11 : i64} {
  func.func @kernel(%arg0: i32, %arg1: memref<4x128xf32, #tpu.memory_space<vmem>>, %arg2: memref<3x128xf32, #tpu.memory_space<vmem>>, %arg3: memref<1x128xf32, #tpu.memory_space<vmem>>, %arg4: memref<64x4xf32, #tpu.memory_space<vmem>>, %arg5: memref<64x3xf32, #tpu.memory_space<vmem>>, %arg6: memref<64x1xf32, #tpu.memory_space<vmem>>, %arg7: memref<64x1xf32, #tpu.memory_space<vmem>>, %arg8: memref<64x1xf32, #tpu.memory_space<vmem>>, %arg9: memref<1x1xf32, #tpu.memory_space<vmem>>, %arg10: memref<1x128xf32, #tpu.memory_space<vmem>>) attributes {dimension_semantics = [#tpu.dimension_semantics<parallel>], iteration_bounds = array<i64: 1>, scalar_prefetch = 0 : i64, scratch_operands = 0 : i64, tpu.core_type = #tpu.core_type<tc>, window_params = [{transform_indices = @transform_0, window_bounds = array<i64: 4, 128>}, {transform_indices = @transform_1, window_bounds = array<i64: 3, 128>}, {transform_indices = @transform_2, window_bounds = array<i64: 1, 128>}, {pipeline_mode = #tpu.pipeline_mode<synchronous>, transform_indices = @transform_3, window_bounds = array<i64: 64, 4>}, {pipeline_mode = #tpu.pipeline_mode<synchronous>, transform_indices = @transform_4, window_bounds = array<i64: 64, 3>}, {pipeline_mode = #tpu.pipeline_mode<synchronous>, transform_indices = @transform_5, window_bounds = array<i64: 64, 1>}, {pipeline_mode = #tpu.pipeline_mode<synchronous>, transform_indices = @transform_6, window_bounds = array<i64: 64, 1>}, {pipeline_mode = #tpu.pipeline_mode<synchronous>, transform_indices = @transform_7, window_bounds = array<i64: 64, 1>}, {pipeline_mode = #tpu.pipeline_mode<synchronous>, transform_indices = @transform_8, window_bounds = array<i64: 1, 1>}, {transform_indices = @transform_9, window_bounds = array<i64: 1, 128>}]} {
    %c0 = arith.constant 0 : index
    %c0_0 = arith.constant 0 : index
    %0 = vector.load %arg4[%c0, %c0_0] : memref<64x4xf32, #tpu.memory_space<vmem>>, vector<64x4xf32>
    %c0_1 = arith.constant 0 : index
    %c0_2 = arith.constant 0 : index
    %1 = vector.load %arg1[%c0_1, %c0_2] : memref<4x128xf32, #tpu.memory_space<vmem>>, vector<4x128xf32>
    %cst = arith.constant dense<0.000000e+00> : vector<64x128xf32>
    %2 = tpu.matmul %0, %1, %cst {dimension_numbers = #tpu.dot_dimension_numbers<[1], [0], [0], [1], [0, 0, 1, 1], [], []>} : vector<64x4xf32>, vector<4x128xf32>, vector<64x128xf32> -> vector<64x128xf32>
    %c0_3 = arith.constant 0 : index
    %c0_4 = arith.constant 0 : index
    %3 = vector.load %arg5[%c0_3, %c0_4] : memref<64x3xf32, #tpu.memory_space<vmem>>, vector<64x3xf32>
    %c0_5 = arith.constant 0 : index
    %c0_6 = arith.constant 0 : index
    %4 = vector.load %arg2[%c0_5, %c0_6] : memref<3x128xf32, #tpu.memory_space<vmem>>, vector<3x128xf32>
    %cst_7 = arith.constant dense<0.000000e+00> : vector<64x128xf32>
    %5 = tpu.matmul %3, %4, %cst_7 {dimension_numbers = #tpu.dot_dimension_numbers<[1], [0], [0], [1], [0, 0, 1, 1], [], []>} : vector<64x3xf32>, vector<3x128xf32>, vector<64x128xf32> -> vector<64x128xf32>
    %6 = arith.addf %2, %5 : vector<64x128xf32>
    %c0_8 = arith.constant 0 : index
    %c0_9 = arith.constant 0 : index
    %7 = vector.load %arg6[%c0_8, %c0_9] : memref<64x1xf32, #tpu.memory_space<vmem>>, vector<64x1xf32>
    %c0_10 = arith.constant 0 : index
    %c0_11 = arith.constant 0 : index
    %8 = vector.load %arg3[%c0_10, %c0_11] : memref<1x128xf32, #tpu.memory_space<vmem>>, vector<1x128xf32>
    %9 = vector.broadcast %7 : vector<64x1xf32> to vector<64x128xf32>
    %10 = vector.broadcast %8 : vector<1x128xf32> to vector<64x128xf32>
    %11 = arith.mulf %9, %10 : vector<64x128xf32>
    %12 = arith.addf %6, %11 : vector<64x128xf32>
    %c0_12 = arith.constant 0 : index
    %c0_13 = arith.constant 0 : index
    %13 = vector.load %arg7[%c0_12, %c0_13] : memref<64x1xf32, #tpu.memory_space<vmem>>, vector<64x1xf32>
    %14 = vector.broadcast %13 : vector<64x1xf32> to vector<64x128xf32>
    %15 = arith.addf %12, %14 : vector<64x128xf32>
    %cst_14 = arith.constant 0.000000e+00 : f32
    %16 = vector.broadcast %cst_14 : f32 to vector<64x128xf32>
    %17 = arith.maximumf %15, %16 : vector<64x128xf32>
    %c0_15 = arith.constant 0 : index
    %c0_16 = arith.constant 0 : index
    %18 = vector.load %arg8[%c0_15, %c0_16] : memref<64x1xf32, #tpu.memory_space<vmem>>, vector<64x1xf32>
    %19 = vector.broadcast %18 : vector<64x1xf32> to vector<64x128xf32>
    %20 = arith.mulf %17, %19 : vector<64x128xf32>
    %cst_17 = arith.constant dense<0.000000e+00> : vector<128xf32>
    %21 = vector.multi_reduction <add>, %20, %cst_17 [0] : vector<64x128xf32> to vector<128xf32>
    %22 = vector.shape_cast %21 : vector<128xf32> to vector<1x128xf32>
    %c0_18 = arith.constant 0 : index
    %c0_19 = arith.constant 0 : index
    %23 = vector.load %arg9[%c0_18, %c0_19] : memref<1x1xf32, #tpu.memory_space<vmem>>, vector<1x1xf32>
    %24 = vector.extract %23[0, 0] : f32 from vector<1x1xf32>
    %25 = vector.broadcast %24 : f32 to vector<1x128xf32>
    %26 = arith.addf %22, %25 : vector<1x128xf32>
    %c0_20 = arith.constant 0 : index
    %c0_21 = arith.constant 0 : index
    %27 = vector.load %arg10[%c0_20, %c0_21] : memref<1x128xf32, #tpu.memory_space<vmem>>, vector<1x128xf32>
    tpu.vector_store %arg10[%c0_20, %c0_21], %26 {strides = array<i32>} : memref<1x128xf32, #tpu.memory_space<vmem>>, vector<1x128xf32>,
    return
  }
  func.func @transform_0(%arg0: i32) -> (i32, i32) {
    %c0_i32 = arith.constant 0 : i32
    %c0_i32_0 = arith.constant 0 : i32
    return %c0_i32, %arg0 : i32, i32
  }
  func.func @transform_1(%arg0: i32) -> (i32, i32) {
    %c0_i32 = arith.constant 0 : i32
    %c0_i32_0 = arith.constant 0 : i32
    return %c0_i32, %arg0 : i32, i32
  }
  func.func @transform_2(%arg0: i32) -> (i32, i32) {
    %c0_i32 = arith.constant 0 : i32
    %c0_i32_0 = arith.constant 0 : i32
    return %c0_i32, %arg0 : i32, i32
  }
  func.func @transform_3(%arg0: i32) -> (i32, i32) {
    %c0_i32 = arith.constant 0 : i32
    %c0_i32_0 = arith.constant 0 : i32
    %c0_i32_1 = arith.constant 0 : i32
    return %c0_i32, %c0_i32_0 : i32, i32
  }
  func.func @transform_4(%arg0: i32) -> (i32, i32) {
    %c0_i32 = arith.constant 0 : i32
    %c0_i32_0 = arith.constant 0 : i32
    %c0_i32_1 = arith.constant 0 : i32
    return %c0_i32, %c0_i32_0 : i32, i32
  }
  func.func @transform_5(%arg0: i32) -> (i32, i32) {
    %c0_i32 = arith.constant 0 : i32
    %c0_i32_0 = arith.constant 0 : i32
    %c0_i32_1 = arith.constant 0 : i32
    return %c0_i32, %c0_i32_0 : i32, i32
  }
  func.func @transform_6(%arg0: i32) -> (i32, i32) {
    %c0_i32 = arith.constant 0 : i32
    %c0_i32_0 = arith.constant 0 : i32
    %c0_i32_1 = arith.constant 0 : i32
    return %c0_i32, %c0_i32_0 : i32, i32
  }
  func.func @transform_7(%arg0: i32) -> (i32, i32) {
    %c0_i32 = arith.constant 0 : i32
    %c0_i32_0 = arith.constant 0 : i32
    %c0_i32_1 = arith.constant 0 : i32
    return %c0_i32, %c0_i32_0 : i32, i32
  }
  func.func @transform_8(%arg0: i32) -> (i32, i32) {
    %c0_i32 = arith.constant 0 : i32
    %c0_i32_0 = arith.constant 0 : i32
    %c0_i32_1 = arith.constant 0 : i32
    return %c0_i32, %c0_i32_0 : i32, i32
  }
  func.func @transform_9(%arg0: i32) -> (i32, i32) {
    %c0_i32 = arith.constant 0 : i32
    %c0_i32_0 = arith.constant 0 : i32
    return %c0_i32, %arg0 : i32, i32
  }
}

</mosaic_0001>

<llo_original>
// kernel: tpu_custom_call.1
$region0: #{tpu_custom_call.1}
  #allocation0 [shape = 'u32[]', space=smem, size = 0x4, offset = 0x4, fixed_abs, tag = 'smem constant byte address 0x4 - core index']
  #allocation1 [shape = 'u32[144,128]{1,0:T(1,128)}', space=vmem, size = 0x12000, scoped, tag = 'internal scratch']
  #allocation2 [shape = 'f32[1,1]{1,0:T(1,128)S(1)}', space=vmem, size = 0x200, scoped, tag = 'scoped memory for tpu_custom_call.1']
  %s0 = inlined_call_operand.vmem [shape: f32[4,128], index: 0, kind: input, shape index: {}]
  %s1 = inlined_call_operand.vmem [shape: f32[3,128], index: 1, kind: input, shape index: {}]
  %s2 = inlined_call_operand.vmem [shape: f32[1,128], index: 2, kind: input, shape index: {}]
  %s3 = inlined_call_operand.vmem [shape: f32[64,4], index: 3, kind: input, shape index: {}]
  %s4 = inlined_call_operand.vmem [shape: f32[64,3], index: 4, kind: input, shape index: {}]
  %s5 = inlined_call_operand.vmem [shape: f32[64,1], index: 5, kind: input, shape index: {}]
  %s6 = inlined_call_operand.vmem [shape: f32[64,1], index: 6, kind: input, shape index: {}]
  %s7 = inlined_call_operand.vmem [shape: f32[64,1], index: 7, kind: input, shape index: {}]
  %s8 = inlined_call_operand.<no memory space> [shape: f32[1,1], index: 8, kind: input, shape index: {}]
  %s9 = inlined_call_operand.hbm [shape: f32[1,128], index: 9, kind: output, shape index: {}]
  %s10 = sld [smem:[#allocation0]]
  $region46: #{tpu_custom_call.1} parent=0
    _
  %s12 = ssub.s32 1, %s10
  %s13 = scalar_select 0, %s12, %s10
  %v14 = vstv %s8
  %15 = vst [vmem:[#allocation2] sm:$0x1] %v14
  $region1: #{tpu_custom_call.1} parent=0
    #allocation3 [shape = 'u8[512]{0}', space=vmem, size = 0x400, scoped, tag = 'output window, operand 0, single buffered']
    #allocation4 [shape = 's32[1]{0}', space=sflag, size = 0x4, scoped, tag = 'scoped memory for tpu_custom_call.1']
    %16 = vsyncpa [#allocation4], 0
    // Predicated region
    $region2: #{tpu_custom_call.1} parent=1 // pred_check
      _
    $region3: #{tpu_custom_call.1} parent=1 // pred_check_branch
      %18 = sbr.rel (0) target = $region5
    $region4: #{tpu_custom_call.1} parent=1 // pred_region
      _
    $region5: #{tpu_custom_call.1} parent=1 // pred_fallthru
      _
    // Predicated region
    $region6: #{tpu_custom_call.1} parent=1 // pred_check
      _
    $region7: #{tpu_custom_call.1} parent=1 // pred_check_branch
      %20 = sbr.rel (0) target = $region9
    $region8: #{tpu_custom_call.1} parent=1 // pred_region
      _
    $region9: #{tpu_custom_call.1} parent=1 // pred_fallthru
      _
    // Predicated region
    $region10: #{tpu_custom_call.1} parent=1 // pred_check
      _
    $region11: #{tpu_custom_call.1} parent=1 // pred_check_branch
      %22 = sbr.rel (0) target = $region13
    $region12: #{tpu_custom_call.1} parent=1 // pred_region
      _
    $region13: #{tpu_custom_call.1} parent=1 // pred_fallthru
      _
    // Predicated region
    $region14: #{tpu_custom_call.1} parent=1 // pred_check
      _
    $region15: #{tpu_custom_call.1} parent=1 // pred_check_branch
      %24 = sbr.rel (0) target = $region17
    $region16: #{tpu_custom_call.1} parent=1 // pred_region
      _
    $region17: #{tpu_custom_call.1} parent=1 // pred_fallthru
      _
    // Predicated region
    $region18: #{tpu_custom_call.1} parent=1 // pred_check
      _
    $region19: #{tpu_custom_call.1} parent=1 // pred_check_branch
      %26 = sbr.rel (0) target = $region21
    $region20: #{tpu_custom_call.1} parent=1 // pred_region
      _
    $region21: #{tpu_custom_call.1} parent=1 // pred_fallthru
      _
    // Predicated region
    $region22: #{tpu_custom_call.1} parent=1 // pred_check
      _
    $region23: #{tpu_custom_call.1} parent=1 // pred_check_branch
      %28 = sbr.rel (0) target = $region25
    $region24: #{tpu_custom_call.1} parent=1 // pred_region
      _
    $region25: #{tpu_custom_call.1} parent=1 // pred_fallthru
      _
    // Predicated region
    $region26: #{tpu_custom_call.1} parent=1 // pred_check
      _
    $region27: #{tpu_custom_call.1} parent=1 // pred_check_branch
      %30 = sbr.rel (0) target = $region29
    $region28: #{tpu_custom_call.1} parent=1 // pred_region
      _
    $region29: #{tpu_custom_call.1} parent=1 // pred_fallthru
      _
    // Predicated region
    $region30: #{tpu_custom_call.1} parent=1 // pred_check
      _
    $region31: #{tpu_custom_call.1} parent=1 // pred_check_branch
      %32 = sbr.rel (0) target = $region33
    $region32: #{tpu_custom_call.1} parent=1 // pred_region
      _
    $region33: #{tpu_custom_call.1} parent=1 // pred_fallthru
      _
    // Predicated region
    $region34: #{tpu_custom_call.1} parent=1 // pred_check
      _
    $region35: #{tpu_custom_call.1} parent=1 // pred_check_branch
      %34 = sbr.rel (0) target = $region37
    $region36: #{tpu_custom_call.1} parent=1 // pred_region
      _
    $region37: #{tpu_custom_call.1} parent=1 // pred_fallthru
      _
    %v35 = vld [vmem:[%s3] sm:$0xff]
    %v36 = vld [vmem:[%s3 + $0x8] sm:$0xff]
    %v37 = vld [vmem:[%s3 + $0x10] sm:$0xff]
    %v38 = vld [vmem:[%s3 + $0x18] sm:$0xff]
    %v39 = vld [vmem:[%s3 + $0x20] sm:$0xff]
    %v40 = vld [vmem:[%s3 + $0x28] sm:$0xff]
    %v41 = vld [vmem:[%s3 + $0x30] sm:$0xff]
    %v42 = vld [vmem:[%s3 + $0x38] sm:$0xff]
    %v43 = vld [vmem:[%s0] sm:$0xf]
    %v44 = vld [vmem:[%s4] sm:$0xff]
    %v45 = vld [vmem:[%s4 + $0x8] sm:$0xff]
    %v46 = vld [vmem:[%s4 + $0x10] sm:$0xff]
    %v47 = vld [vmem:[%s4 + $0x18] sm:$0xff]
    %v48 = vld [vmem:[%s4 + $0x20] sm:$0xff]
    %v49 = vld [vmem:[%s4 + $0x28] sm:$0xff]
    %v50 = vld [vmem:[%s4 + $0x30] sm:$0xff]
    %v51 = vld [vmem:[%s4 + $0x38] sm:$0xff]
    %v52 = vld [vmem:[%s1] sm:$0x7]
    %vm53 = vcmask 23552
    %v55 = vsel %vm53, %v44, 0
    %v58 = vsel %vm53, %v45, 0
    %v61 = vsel %vm53, %v46, 0
    %v64 = vsel %vm53, %v47, 0
    %v67 = vsel %vm53, %v48, 0
    %v70 = vsel %vm53, %v49, 0
    %v73 = vsel %vm53, %v50, 0
    %v76 = vsel %vm53, %v51, 0
    %vm78 = vcmask 1042432
    %v80 = vsel %vm78, %v52, 0
    %82 = vmatprep.subr.mxu0 0.0
    %83 = vmatpush1.msra.mxu0 %v80
    %84 = vmatprep.subr.mxu0 0.0
    %85 = vmatpush1.msra.mxu0 0.0
    %86 = vmatprep.subr.mxu0 0.0
    %87 = vmatpush1.msra.mxu0 0.0
    %88 = vmatprep.subr.mxu0 0.0
    %89 = vmatpush1.msra.mxu0 0.0
    %90 = vmatprep.subr.mxu0 0.0
    %91 = vmatpush1.msra.mxu0 0.0
    %92 = vmatprep.subr.mxu0 0.0
    %93 = vmatpush1.msra.mxu0 0.0
    %94 = vmatprep.subr.mxu0 0.0
    %95 = vmatpush1.msra.mxu0 0.0
    %96 = vmatprep.subr.mxu0 0.0
    %97 = vmatpush1.msra.mxu0 0.0
    %98 = vmatprep.subr.mxu0 0.0
    %99 = vmatpush1.msra.mxu0 0.0
    %100 = vmatprep.subr.mxu0 0.0
    %101 = vmatpush1.msra.mxu0 0.0
    %102 = vmatprep.subr.mxu0 0.0
    %103 = vmatpush1.msra.mxu0 0.0
    %104 = vmatprep.subr.mxu0 0.0
    %105 = vmatpush1.msra.mxu0 0.0
    %106 = vmatprep.subr.mxu0 0.0
    %107 = vmatpush1.msra.mxu0 0.0
    %108 = vmatprep.subr.mxu0 0.0
    %109 = vmatpush1.msra.mxu0 0.0
    %110 = vmatprep.subr.mxu0 0.0
    %111 = vmatpush1.msra.mxu0 0.0
    %112 = vmatprep.subr.mxu0 0.0
    %113 = vmatpush1.msra.mxu0 0.0
    %114 = vmatprep.subr.mxu0 0.0
    %115 = vmatpush1.msra.mxu0 0.0
    %116 = vmatprep.subr.mxu0 0.0
    %117 = vmatpush1.msra.mxu0 0.0
    %118 = vmatprep.subr.mxu0 0.0
    %119 = vmatpush1.msra.mxu0 0.0
    %120 = vmatprep.subr.mxu0 0.0
    %121 = vmatpush1.msra.mxu0 0.0
    %122 = vmatprep.subr.mxu0 0.0
    %123 = vmatpush1.msra.mxu0 0.0
    %124 = vmatprep.subr.mxu0 0.0
    %125 = vmatpush1.msra.mxu0 0.0
    %126 = vmatprep.subr.mxu0 0.0
    %127 = vmatpush1.msra.mxu0 0.0
    %128 = vmatprep.subr.mxu0 0.0
    %129 = vmatpush1.msra.mxu0 0.0
    %130 = vmatprep.subr.mxu0 0.0
    %131 = vmatpush1.msra.mxu0 0.0
    %132 = vmatprep.subr.mxu0 0.0
    %133 = vmatpush1.msra.mxu0 0.0
    %134 = vmatprep.subr.mxu0 0.0
    %135 = vmatpush1.msra.mxu0 0.0
    %136 = vmatprep.subr.mxu0 0.0
    %137 = vmatpush1.msra.mxu0 0.0
    %138 = vmatprep.subr.mxu0 0.0
    %139 = vmatpush1.msra.mxu0 0.0
    %140 = vmatprep.subr.mxu0 0.0
    %141 = vmatpush1.msra.mxu0 0.0
    %142 = vmatprep.subr.mxu0 0.0
    %143 = vmatpush1.msra.mxu0 0.0
    %144 = vmatprep.subr.mxu0 0.0
    %145 = vmatpush1.msra.mxu0 0.0
    %146 = vmatprep.mubr.f32.mxu0 0.0
    %147 = vmatmul.mubr.f32.gmra.mrb[0].mxu0 %v55
    %v148 = vpop.f32.mrb[0].mxu0
    %v149 = vadd.f32 0.0, %v148
    %v150 = vpop.f32.mrb[0].mxu0
    %151 = vmatprep.mubr.f32.mxu0 0.0
    %152 = vmatmul.mubr.f32.gmra.mrb[0].mxu0 %v58
    %v153 = vpop.f32.mrb[0].mxu0
    %v154 = vadd.f32 0.0, %v153
    %v155 = vpop.f32.mrb[0].mxu0
    %156 = vmatprep.mubr.f32.mxu0 0.0
    %157 = vmatmul.mubr.f32.gmra.mrb[0].mxu0 %v61
    %v158 = vpop.f32.mrb[0].mxu0
    %v159 = vadd.f32 0.0, %v158
    %v160 = vpop.f32.mrb[0].mxu0
    %161 = vmatprep.mubr.f32.mxu0 0.0
    %162 = vmatmul.mubr.f32.gmra.mrb[0].mxu0 %v64
    %v163 = vpop.f32.mrb[0].mxu0
    %v164 = vadd.f32 0.0, %v163
    %v165 = vpop.f32.mrb[0].mxu0
    %166 = vmatprep.mubr.f32.mxu0 0.0
    %167 = vmatmul.mubr.f32.gmra.mrb[0].mxu0 %v67
    %v168 = vpop.f32.mrb[0].mxu0
    %v169 = vadd.f32 0.0, %v168
    %v170 = vpop.f32.mrb[0].mxu0
    %171 = vmatprep.mubr.f32.mxu0 0.0
    %172 = vmatmul.mubr.f32.gmra.mrb[0].mxu0 %v70
    %v173 = vpop.f32.mrb[0].mxu0
    %v174 = vadd.f32 0.0, %v173
    %v175 = vpop.f32.mrb[0].mxu0
    %176 = vmatprep.mubr.f32.mxu0 0.0
    %177 = vmatmul.mubr.f32.gmra.mrb[0].mxu0 %v73
    %v178 = vpop.f32.mrb[0].mxu0
    %v179 = vadd.f32 0.0, %v178
    %v180 = vpop.f32.mrb[0].mxu0
    %181 = vmatprep.mubr.f32.mxu0 0.0
    %182 = vmatmul.mubr.f32.gmra.mrb[0].mxu0 %v76
    %v183 = vpop.f32.mrb[0].mxu0
    %v184 = vadd.f32 0.0, %v183
    %v185 = vpop.f32.mrb[0].mxu0
    %186 = vdwg.mxu0
    %vm187 = vcmask 31744
    %v189 = vsel %vm187, %v35, 0
    %v192 = vsel %vm187, %v36, 0
    %v195 = vsel %vm187, %v37, 0
    %v198 = vsel %vm187, %v38, 0
    %v201 = vsel %vm187, %v39, 0
    %v204 = vsel %vm187, %v40, 0
    %v207 = vsel %vm187, %v41, 0
    %v210 = vsel %vm187, %v42, 0
    %vm212 = vcmask 1043456
    %v214 = vsel %vm212, %v43, 0
    %216 = vmatprep.subr.mxu0 0.0
    %217 = vmatpush1.msra.mxu0 %v214
    %218 = vmatprep.subr.mxu0 0.0
    %219 = vmatpush1.msra.mxu0 0.0
    %220 = vmatprep.subr.mxu0 0.0
    %221 = vmatpush1.msra.mxu0 0.0
    %222 = vmatprep.subr.mxu0 0.0
    %223 = vmatpush1.msra.mxu0 0.0
    %224 = vmatprep.subr.mxu0 0.0
    %225 = vmatpush1.msra.mxu0 0.0
    %226 = vmatprep.subr.mxu0 0.0
    %227 = vmatpush1.msra.mxu0 0.0
    %228 = vmatprep.subr.mxu0 0.0
    %229 = vmatpush1.msra.mxu0 0.0
    %230 = vmatprep.subr.mxu0 0.0
    %231 = vmatpush1.msra.mxu0 0.0
    %232 = vmatprep.subr.mxu0 0.0
    %233 = vmatpush1.msra.mxu0 0.0
    %234 = vmatprep.subr.mxu0 0.0
    %235 = vmatpush1.msra.mxu0 0.0
    %236 = vmatprep.subr.mxu0 0.0
    %237 = vmatpush1.msra.mxu0 0.0
    %238 = vmatprep.subr.mxu0 0.0
    %239 = vmatpush1.msra.mxu0 0.0
    %240 = vmatprep.subr.mxu0 0.0
    %241 = vmatpush1.msra.mxu0 0.0
    %242 = vmatprep.subr.mxu0 0.0
    %243 = vmatpush1.msra.mxu0 0.0
    %244 = vmatprep.subr.mxu0 0.0
    %245 = vmatpush1.msra.mxu0 0.0
    %246 = vmatprep.subr.mxu0 0.0
    %247 = vmatpush1.msra.mxu0 0.0
    %248 = vmatprep.subr.mxu0 0.0
    %249 = vmatpush1.msra.mxu0 0.0
    %250 = vmatprep.subr.mxu0 0.0
    %251 = vmatpush1.msra.mxu0 0.0
    %252 = vmatprep.subr.mxu0 0.0
    %253 = vmatpush1.msra.mxu0 0.0
    %254 = vmatprep.subr.mxu0 0.0
    %255 = vmatpush1.msra.mxu0 0.0
    %256 = vmatprep.subr.mxu0 0.0
    %257 = vmatpush1.msra.mxu0 0.0
    %258 = vmatprep.subr.mxu0 0.0
    %259 = vmatpush1.msra.mxu0 0.0
    %260 = vmatprep.subr.mxu0 0.0
    %261 = vmatpush1.msra.mxu0 0.0
    %262 = vmatprep.subr.mxu0 0.0
    %263 = vmatpush1.msra.mxu0 0.0
    %264 = vmatprep.subr.mxu0 0.0
    %265 = vmatpush1.msra.mxu0 0.0
    %266 = vmatprep.subr.mxu0 0.0
    %267 = vmatpush1.msra.mxu0 0.0
    %268 = vmatprep.subr.mxu0 0.0
    %269 = vmatpush1.msra.mxu0 0.0
    %270 = vmatprep.subr.mxu0 0.0
    %271 = vmatpush1.msra.mxu0 0.0
    %272 = vmatprep.subr.mxu0 0.0
    %273 = vmatpush1.msra.mxu0 0.0
    %274 = vmatprep.subr.mxu0 0.0
    %275 = vmatpush1.msra.mxu0 0.0
    %276 = vmatprep.subr.mxu0 0.0
    %277 = vmatpush1.msra.mxu0 0.0
    %278 = vmatprep.subr.mxu0 0.0
    %279 = vmatpush1.msra.mxu0 0.0
    %280 = vmatprep.mubr.f32.mxu0 0.0
    %281 = vmatmul.mubr.f32.gmra.mrb[0].mxu0 %v189
    %v282 = vpop.f32.mrb[0].mxu0
    %v283 = vadd.f32 %v149, %v282
    %v284 = vpop.f32.mrb[0].mxu0
    %285 = vmatprep.mubr.f32.mxu0 0.0
    %286 = vmatmul.mubr.f32.gmra.mrb[0].mxu0 %v192
    %v287 = vpop.f32.mrb[0].mxu0
    %v288 = vadd.f32 %v154, %v287
    %v289 = vpop.f32.mrb[0].mxu0
    %290 = vmatprep.mubr.f32.mxu0 0.0
    %291 = vmatmul.mubr.f32.gmra.mrb[0].mxu0 %v195
    %v292 = vpop.f32.mrb[0].mxu0
    %v293 = vadd.f32 %v159, %v292
    %v294 = vpop.f32.mrb[0].mxu0
    %295 = vmatprep.mubr.f32.mxu0 0.0
    %296 = vmatmul.mubr.f32.gmra.mrb[0].mxu0 %v198
    %v297 = vpop.f32.mrb[0].mxu0
    %v298 = vadd.f32 %v164, %v297
    %v299 = vpop.f32.mrb[0].mxu0
    %300 = vmatprep.mubr.f32.mxu0 0.0
    %301 = vmatmul.mubr.f32.gmra.mrb[0].mxu0 %v201
    %v302 = vpop.f32.mrb[0].mxu0
    %v303 = vadd.f32 %v169, %v302
    %v304 = vpop.f32.mrb[0].mxu0
    %305 = vmatprep.mubr.f32.mxu0 0.0
    %306 = vmatmul.mubr.f32.gmra.mrb[0].mxu0 %v204
    %v307 = vpop.f32.mrb[0].mxu0
    %v308 = vadd.f32 %v174, %v307
    %v309 = vpop.f32.mrb[0].mxu0
    %310 = vmatprep.mubr.f32.mxu0 0.0
    %311 = vmatmul.mubr.f32.gmra.mrb[0].mxu0 %v207
    %v312 = vpop.f32.mrb[0].mxu0
    %v313 = vadd.f32 %v179, %v312
    %v314 = vpop.f32.mrb[0].mxu0
    %315 = vmatprep.mubr.f32.mxu0 0.0
    %316 = vmatmul.mubr.f32.gmra.mrb[0].mxu0 %v210
    %v317 = vpop.f32.mrb[0].mxu0
    %v318 = vadd.f32 %v184, %v317
    %v319 = vpop.f32.mrb[0].mxu0
    %320 = vdwg.mxu0
    %v321 = vld [vmem:[%s5] sm:$0xff]
    %v322 = vld [vmem:[%s5 + $0x8] sm:$0xff]
    %v323 = vld [vmem:[%s5 + $0x10] sm:$0xff]
    %v324 = vld [vmem:[%s5 + $0x18] sm:$0xff]
    %v325 = vld [vmem:[%s5 + $0x20] sm:$0xff]
    %v326 = vld [vmem:[%s5 + $0x28] sm:$0xff]
    %v327 = vld [vmem:[%s5 + $0x30] sm:$0xff]
    %v328 = vld [vmem:[%s5 + $0x38] sm:$0xff]
    %v329 = vld [vmem:[%s2] sm:$0x1]
    %331 = vset.pattern.permute.xlu0 0
    %332 = vperm.xlu0 %331, %v321
    %v333 = vpop.permute.xlu0 %332
    %336 = vset.pattern.permute.xlu0 0
    %337 = vperm.xlu0 %336, %v322
    %v338 = vpop.permute.xlu0 %337
    %341 = vset.pattern.permute.xlu0 0
    %342 = vperm.xlu0 %341, %v323
    %v343 = vpop.permute.xlu0 %342
    %346 = vset.pattern.permute.xlu0 0
    %347 = vperm.xlu0 %346, %v324
    %v348 = vpop.permute.xlu0 %347
    %351 = vset.pattern.permute.xlu0 0
    %352 = vperm.xlu0 %351, %v325
    %v353 = vpop.permute.xlu0 %352
    %356 = vset.pattern.permute.xlu0 0
    %357 = vperm.xlu0 %356, %v326
    %v358 = vpop.permute.xlu0 %357
    %361 = vset.pattern.permute.xlu0 0
    %362 = vperm.xlu0 %361, %v327
    %v363 = vpop.permute.xlu0 %362
    %366 = vset.pattern.permute.xlu0 0
    %367 = vperm.xlu0 %366, %v328
    %v368 = vpop.permute.xlu0 %367
    %v371 = vlaneseq
    %v372 = vshrl.u32 %v371, 7
    %v373 = vsub.s32 0, %v372
    %v374 = vrot.slane %v329, %v373
    %v376 = vmul.f32 %v333, %v374
    %v377 = vmul.f32 %v338, %v374
    %v378 = vmul.f32 %v343, %v374
    %v379 = vmul.f32 %v348, %v374
    %v380 = vmul.f32 %v353, %v374
    %v381 = vmul.f32 %v358, %v374
    %v382 = vmul.f32 %v363, %v374
    %v383 = vmul.f32 %v368, %v374
    %v384 = vadd.f32 %v283, %v376
    %v385 = vadd.f32 %v288, %v377
    %v386 = vadd.f32 %v293, %v378
    %v387 = vadd.f32 %v298, %v379
    %v388 = vadd.f32 %v303, %v380
    %v389 = vadd.f32 %v308, %v381
    %v390 = vadd.f32 %v313, %v382
    %v391 = vadd.f32 %v318, %v383
    %v392 = vld [vmem:[%s6] sm:$0xff]
    %v393 = vld [vmem:[%s6 + $0x8] sm:$0xff]
    %v394 = vld [vmem:[%s6 + $0x10] sm:$0xff]
    %v395 = vld [vmem:[%s6 + $0x18] sm:$0xff]
    %v396 = vld [vmem:[%s6 + $0x20] sm:$0xff]
    %v397 = vld [vmem:[%s6 + $0x28] sm:$0xff]
    %v398 = vld [vmem:[%s6 + $0x30] sm:$0xff]
    %v399 = vld [vmem:[%s6 + $0x38] sm:$0xff]
    %401 = vset.pattern.permute.xlu0 0
    %402 = vperm.xlu0 %401, %v392
    %v403 = vpop.permute.xlu0 %402
    %406 = vset.pattern.permute.xlu0 0
    %407 = vperm.xlu0 %406, %v393
    %v408 = vpop.permute.xlu0 %407
    %411 = vset.pattern.permute.xlu0 0
    %412 = vperm.xlu0 %411, %v394
    %v413 = vpop.permute.xlu0 %412
    %416 = vset.pattern.permute.xlu0 0
    %417 = vperm.xlu0 %416, %v395
    %v418 = vpop.permute.xlu0 %417
    %421 = vset.pattern.permute.xlu0 0
    %422 = vperm.xlu0 %421, %v396
    %v423 = vpop.permute.xlu0 %422
    %426 = vset.pattern.permute.xlu0 0
    %427 = vperm.xlu0 %426, %v397
    %v428 = vpop.permute.xlu0 %427
    %431 = vset.pattern.permute.xlu0 0
    %432 = vperm.xlu0 %431, %v398
    %v433 = vpop.permute.xlu0 %432
    %436 = vset.pattern.permute.xlu0 0
    %437 = vperm.xlu0 %436, %v399
    %v438 = vpop.permute.xlu0 %437
    %v440 = vadd.f32 %v384, %v403
    %v441 = vadd.f32 %v385, %v408
    %v442 = vadd.f32 %v386, %v413
    %v443 = vadd.f32 %v387, %v418
    %v444 = vadd.f32 %v388, %v423
    %v445 = vadd.f32 %v389, %v428
    %v446 = vadd.f32 %v390, %v433
    %v447 = vadd.f32 %v391, %v438
    %v448 = vmax.f32 %v440, 0.0
    %v449 = vmax.f32 %v441, 0.0
    %v450 = vmax.f32 %v442, 0.0
    %v451 = vmax.f32 %v443, 0.0
    %v452 = vmax.f32 %v444, 0.0
    %v453 = vmax.f32 %v445, 0.0
    %v454 = vmax.f32 %v446, 0.0
    %v455 = vmax.f32 %v447, 0.0
    %v456 = vld [vmem:[%s7] sm:$0xff]
    %v457 = vld [vmem:[%s7 + $0x8] sm:$0xff]
    %v458 = vld [vmem:[%s7 + $0x10] sm:$0xff]
    %v459 = vld [vmem:[%s7 + $0x18] sm:$0xff]
    %v460 = vld [vmem:[%s7 + $0x20] sm:$0xff]
    %v461 = vld [vmem:[%s7 + $0x28] sm:$0xff]
    %v462 = vld [vmem:[%s7 + $0x30] sm:$0xff]
    %v463 = vld [vmem:[%s7 + $0x38] sm:$0xff]
    %465 = vset.pattern.permute.xlu0 0
    %466 = vperm.xlu0 %465, %v456
    %v467 = vpop.permute.xlu0 %466
    %470 = vset.pattern.permute.xlu0 0
    %471 = vperm.xlu0 %470, %v457
    %v472 = vpop.permute.xlu0 %471
    %475 = vset.pattern.permute.xlu0 0
    %476 = vperm.xlu0 %475, %v458
    %v477 = vpop.permute.xlu0 %476
    %480 = vset.pattern.permute.xlu0 0
    %481 = vperm.xlu0 %480, %v459
    %v482 = vpop.permute.xlu0 %481
    %485 = vset.pattern.permute.xlu0 0
    %486 = vperm.xlu0 %485, %v460
    %v487 = vpop.permute.xlu0 %486
    %490 = vset.pattern.permute.xlu0 0
    %491 = vperm.xlu0 %490, %v461
    %v492 = vpop.permute.xlu0 %491
    %495 = vset.pattern.permute.xlu0 0
    %496 = vperm.xlu0 %495, %v462
    %v497 = vpop.permute.xlu0 %496
    %500 = vset.pattern.permute.xlu0 0
    %501 = vperm.xlu0 %500, %v463
    %v502 = vpop.permute.xlu0 %501
    %v504 = vmul.f32 %v448, %v467
    %v505 = vmul.f32 %v449, %v472
    %v506 = vmul.f32 %v450, %v477
    %v507 = vmul.f32 %v451, %v482
    %v508 = vmul.f32 %v452, %v487
    %v509 = vmul.f32 %v453, %v492
    %v510 = vmul.f32 %v454, %v497
    %v511 = vmul.f32 %v455, %v502
    %v512 = vadd.f32 %v504, %v505
    %v513 = vadd.f32 %v512, %v506
    %v514 = vadd.f32 %v513, %v507
    %v515 = vadd.f32 %v514, %v508
    %v516 = vadd.f32 %v515, %v509
    %v517 = vadd.f32 %v516, %v510
    %v518 = vadd.f32 %v517, %v511
    %v519 = vrot.slane %v518, 4
    %v520 = vadd.f32 %v518, %v519
    %v521 = vrot.slane %v520, 2
    %v522 = vadd.f32 %v520, %v521
    %v523 = vrot.slane %v522, 1
    %v524 = vadd.f32 %v522, %v523
    %v525 = vld [vmem:[#allocation2] sm:$0x1]
    %s526 = vtos %v525
    %v527 = vstv %s526
    %v528 = vadd.f32 %v524, %v527
    %529 = vst [vmem:[#allocation3] sm:$0x1] %v528
    // Predicated region
    $region38: #{tpu_custom_call.1} parent=1 // pred_check
      _
    $region39: #{tpu_custom_call.1} parent=1 // pred_check_branch
      %531 = sbr.rel (0) target = $region41
    $region40: #{tpu_custom_call.1} parent=1 // pred_region
      %s533 = ssub.s32 16, 16
      %534 = vsyncadd [#allocation4], %s533
      %s536 = sshll.u32 [#allocation3], 4
      %s537 = int_to_ptr.vmem [resolvable:$true] %s536
      %539 = dma.vmem_to_hbm [thread:$0]  %s537, 16, %s9, [#allocation4]
    $region41: #{tpu_custom_call.1} parent=1 // pred_fallthru
      _
    // Predicated region
    $region42: #{tpu_custom_call.1} parent=1 // pred_check
      _
    $region43: #{tpu_custom_call.1} parent=1 // pred_check_branch
      %541 = sbr.rel (0) target = $region45
    $region44: #{tpu_custom_call.1} parent=1 // pred_region
      %542 = dma.done [#allocation4], 16
    $region45: #{tpu_custom_call.1} parent=1 // pred_fallthru
      _
    %543 = vsyncpa [#allocation4], 1

</llo_original>
